<compile_context>
chip_gen: v5e
topology: v5e:2x2
jax: 0.10.0
libtpu: 0.0.40
codegen_flags: <defaults>
</compile_context>

<pallas_src>
import math
import numpy as np
import jax
import jax.numpy as jnp
from jax import lax
from jax.experimental import pallas as pl
from jax.experimental.pallas import tpu as pltpu

VMEM = pltpu.MemorySpace.VMEM


def crack(n):
    """Factor n into (rows, cols) as close to square as possible."""
    a = int(math.isqrt(n))
    while n % a != 0:
        a -= 1
    return n // a, a


# ----------------------------- POVM construction -----------------------------
def tetrahedral_povm():
    s = np.array([[1, 1, 1], [1, -1, -1], [-1, 1, -1], [-1, -1, 1]],
                 dtype=np.float64) / np.sqrt(3.0)
    i2 = np.eye(2, dtype=np.complex128)
    sx = np.array([[0, 1], [1, 0]], dtype=np.complex128)
    sy = np.array([[0, -1j], [1j, 0]], dtype=np.complex128)
    sz = np.array([[1, 0], [0, -1]], dtype=np.complex128)
    return np.stack([0.25 * (i2 + s[k, 0] * sx + s[k, 1] * sy + s[k, 2] * sz)
                     for k in range(4)])                              # (4, 2, 2)


def kron_povm_ops(M, num_qubits):
    ops = M
    for _ in range(num_qubits - 1):
        ops = np.stack([np.kron(a, m) for a in ops for m in M])
    return ops   # (K**N, 2**N, 2**N)


# --------------------------- constant-slab packing ----------------------------
def _round8(n):
    return ((n + 7) // 8) * 8


def pack_constant_slab(blocks):
    """Pack named 2-D f32 blocks into ONE slab.

    Every block starts on a row that is a multiple of 8 and a column that is a
    multiple of 128, so every in-kernel view is a cheap static slice of a single
    VMEM-resident operand (one entry DMA instead of one per constant).
    Returns (slab np.float32, views: name -> (r0, r1, c0, c1))."""
    wide = [(n, a) for n, a in blocks if a.shape[1] > 128]
    narrow = [(n, a) for n, a in blocks if a.shape[1] <= 128]
    width = max([128] + [a.shape[1] for _, a in wide])
    width = ((width + 127) // 128) * 128

    views = {}
    cursor = 0                                    # wide blocks: stacked on top
    for name, a in wide:
        views[name] = (cursor, cursor + a.shape[0], 0, a.shape[1])
        cursor += _round8(a.shape[0])
    wide_rows = cursor

    nbands = width // 128                         # narrow blocks: balanced bands
    band_h = [0] * nbands
    for name, a in sorted(narrow, key=lambda kv: -kv[1].shape[0]):
        b = int(np.argmin(band_h))
        r0 = wide_rows + band_h[b]
        views[name] = (r0, r0 + a.shape[0], b * 128, b * 128 + a.shape[1])
        band_h[b] += _round8(a.shape[0])

    rows = _round8(max(wide_rows + max(band_h + [0]), 8))
    slab = np.zeros((rows, width), np.float32)
    for name, a in blocks:
        r0, r1, c0, c1 = views[name]
        slab[r0:r1, c0:c1] = a
    return slab, {k: tuple(int(v) for v in vv) for k, vv in views.items()}


# ------------------------------ fused kernel ----------------------------------
def make_net_conv_kernel(views, trace_col):
    def kernel(patches_ref, c_ref, out_ref):
        f32 = jnp.float32

        def V(name):                    # static, tile-aligned view of the slab
            r0, r1, c0, c1 = views[name]
            return c_ref[r0:r1, c0:c1]

        # conv 3x3 (pad 1) + bias + ReLU for all four 2x2 max-pool phases: ONE matmul
        y = jnp.dot(patches_ref[...], V("wc"),
                    preferred_element_type=f32) + V("bc")
        y = jnp.maximum(y, 0.0)                                     # (4*P, C)

        # 2x2 max-pool == elementwise max over the 4 phase row-blocks
        npool = y.shape[0] // 4
        pooled = jnp.maximum(
            jnp.maximum(y[0:npool], y[npool:2 * npool]),
            jnp.maximum(y[2 * npool:3 * npool], y[3 * npool:4 * npool]))  # (P, C)

        # fc1 (NCHW flatten expressed with constant 0/1 matrices); XLU row-sum
        pooled_rep = jnp.dot(pooled, V("repc"),
                             preferred_element_type=f32)            # (P, H*C)
        colsum = jnp.sum(pooled_rep * V("w1big"), axis=0, keepdims=True)  # (1, H*C)
        h = jnp.maximum(jnp.dot(colsum, V("gfc"),
                                preferred_element_type=f32) + V("b1"), 0.0)  # (1, H)

        # fc2 folded into the outer-product expansion of t:
        #   uE[a*dd+b] = t_a , uF[a*dd+b] = t_b  ->  v = vec(t t^T)
        uE = jnp.dot(h, V("w2e"), preferred_element_type=f32) + V("b2e")  # (1, dd*dd)
        uF = jnp.dot(h, V("w2f"), preferred_element_type=f32) + V("b2f")
        v = uE * uF

        # chol_h map + POVM measurement + trace, ONE matmul:
        #   pq[:, m]         = t^T Q_m t  (unnormalised selected POVM probs)
        #   pq[:, trace_col] = t^T D t    = Tr(T^H T)
        pq = jnp.dot(v, V("qmat"), preferred_element_type=f32)      # (1, 128)
        trace = pq[:, trace_col:trace_col + 1]
        out_ref[...] = pq * pl.reciprocal(trace, approx=True)
    return kernel


# --------------------------------- model --------------------------------------
class NetConvPallas:
    def __init__(self, in_size, num_qubits, P_idxs, M, key):
        assert num_qubits <= 3, "only the num_qubits <= 3 branch is implemented"
        self.N = num_qubits
        self.out_size = 4 ** num_qubits            # mixed state
        out_log = 4 * num_qubits
        self.out_log = out_log
        self.in_size_row, self.in_size_col = crack(in_size)
        hp, wp = self.in_size_row // 2, self.in_size_col // 2
        self.hp, self.wp = hp, wp
        n_ch = 10
        n_pool = hp * wp
        fc_in = n_ch * n_pool
        self.P_idxs = np.asarray(P_idxs)
        self.n_sel = int(self.P_idxs.shape[0])
        d = 2 ** num_qubits
        dd = d * d
        assert out_log * n_ch <= 128
        assert self.n_sel < 127

        k = jax.random.split(key, 6)
        self.conv_w = 0.3 * jax.random.normal(k[0], (n_ch, 1, 3, 3), jnp.float32)
        self.conv_b = 0.1 * jax.random.normal(k[1], (n_ch,), jnp.float32)
        self.W1 = 0.1 * jax.random.normal(k[2], (out_log, fc_in), jnp.float32)
        self.b1 = 0.1 * jax.random.normal(k[3], (out_log,), jnp.float32)
        self.W2 = 0.2 * jax.random.normal(k[4], (self.out_size, out_log), jnp.float32)
        self.b2 = 0.2 * jax.random.normal(k[5], (self.out_size,), jnp.float32)

        # ---------- host-side (float64) constant construction ----------
        conv_w = np.asarray(self.conv_w, np.float64)
        conv_b = np.asarray(self.conv_b, np.float64)
        W1 = np.asarray(self.W1, np.float64)
        b1 = np.asarray(self.b1, np.float64)
        W2 = np.asarray(self.W2, np.float64)
        b2 = np.asarray(self.b2, np.float64)

        wc = conv_w.reshape(n_ch, 9).T                               # (9, C)
        bc = conv_b.reshape(1, n_ch)                                 # (1, C)
        # RepC[c', j*C + c] = (c' == c)
        repc = np.tile(np.eye(n_ch), (1, out_log))                   # (C, H*C)
        # W1big[p, j*C + c] = W1[j, c*P + p]   (PyTorch NCHW flatten order)
        w1big = (W1.reshape(out_log, n_ch, n_pool)
                 .transpose(2, 0, 1).reshape(n_pool, out_log * n_ch))
        # Gfc[j*C + c, j'] = (j == j')
        gfc = np.kron(np.eye(out_log), np.ones((n_ch, 1)))           # (H*C, H)
        b1r = b1.reshape(1, out_log)

        # ---------- POVM operators + chol_h quadratic forms ----------
        ops = kron_povm_ops(np.asarray(M), num_qubits)               # (K^N, d, d)
        self.ops = ops
        # Linear map t -> T (Hermitian), L[a] = dT/dt_a, matching the torch code.
        L = np.zeros((dd, d, d), dtype=np.complex128)
        for a in range(dd):
            e = np.zeros(dd, np.float64)
            e[a] = 1.0
            Tm = e.reshape(d, d)
            A = np.tril(Tm) + np.tril(Tm, -1).T
            B = np.triu(Tm, 1).T - np.triu(Tm, 1)
            L[a] = A + 1j * B
        # C_k[a,b] = Tr(L_a^H L_b Op_k)  ->  P_unnorm_k(t) = t^T Re(C_k) t
        Cq = np.einsum('aji,bjl,kli->kab', L.conj(), L, ops)
        Q = 0.5 * (Cq.real + np.transpose(Cq.real, (0, 2, 1)))       # (K^N, dd, dd)
        Dmat = np.einsum('aji,bji->ab', L.conj(), L).real            # Tr(T^H T) = t^T D t
        Qsel = Q[self.P_idxs]                                        # (n_sel, dd, dd)

        # Qmat[a*dd+b, m] = Qsel[m,a,b]; trace quadratic form in lane `trace_col`.
        trace_col = 127
        qmat = np.zeros((dd * dd, 128), np.float64)
        qmat[:, :self.n_sel] = np.transpose(Qsel, (1, 2, 0)).reshape(dd * dd, self.n_sel)
        qmat[:, trace_col] = Dmat.reshape(dd * dd)

        # fc2 folded with the outer-product expansion matrices E, F:
        #   E[a, a*dd+b] = 1 ,  F[b, a*dd+b] = 1
        E = np.kron(np.eye(dd), np.ones((1, dd)))
        F = np.tile(np.eye(dd), (1, dd))
        W2T = W2.T                                                   # (H, dd)
        w2e = W2T @ E                                                # (H, dd*dd)
        w2f = W2T @ F
        b2e = b2.reshape(1, dd) @ E                                  # (1, dd*dd)
        b2f = b2.reshape(1, dd) @ F

        blocks = [("wc", wc), ("bc", bc), ("repc", repc), ("w1big", w1big),
                  ("gfc", gfc), ("b1", b1r), ("qmat", qmat),
                  ("w2e", w2e), ("w2f", w2f), ("b2e", b2e), ("b2f", b2f)]
        slab_np, views = pack_constant_slab(
            [(n, np.asarray(a, np.float32)) for n, a in blocks])
        self.slab = jnp.asarray(slab_np)                             # ONE constant operand
        self._views = views
        self._trace_col = trace_col
        self._kernel = make_net_conv_kernel(views, trace_col)
        self._jit_forward = jax.jit(self._forward_impl)

    # ---------------------------- Pallas forward -----------------------------
    def _forward_impl(self, x):
        H, W = self.in_size_row, self.in_size_col
        hp, wp = self.hp, self.wp
        x2d = x.reshape(H, W).astype(jnp.float32)        # X.view(1, 1, H, W)

        # im2col grouped by 2x2 max-pool window phase (fused XLA glue under jit):
        #   row index = (dr*2+dc) * (hp*wp) + (pr*wp + pc), col index = di*3+dj
        xpad = jnp.pad(x2d, 1)
        shifted = jnp.stack([xpad[di:di + H, dj:dj + W]
                             for di in range(3) for dj in range(3)], axis=-1)
        patches = (shifted.reshape(hp, 2, wp, 2, 9)
                   .transpose(1, 3, 0, 2, 4)
                   .reshape(4 * hp * wp, 9))

        out = pl.pallas_call(
            self._kernel,
            out_shape=jax.ShapeDtypeStruct((1, 128), jnp.float32),   # lane-dense store
            in_specs=[pl.BlockSpec(memory_space=VMEM),
                      pl.BlockSpec(memory_space=VMEM)],
            out_specs=pl.BlockSpec(memory_space=VMEM),
        )(patches, self.slab)
        return out[0, :self.n_sel]                       # P_real, shape (n_sel,)

    def forward(self, x):
        return self._jit_forward(x)

    # --------------------- plain-JAX reference (for checking) ----------------
    def reference_forward(self, x):
        H, W = self.in_size_row, self.in_size_col
        hi = lax.Precision.HIGHEST
        xr = x.reshape(1, 1, H, W).astype(jnp.float32)
        y = lax.conv_general_dilated(xr, self.conv_w, (1, 1), ((1, 1), (1, 1)),
                                     dimension_numbers=('NCHW', 'OIHW', 'NCHW'),
                                     precision=hi)
        y = jnp.maximum(y + self.conv_b.reshape(1, 10, 1, 1), 0.0)
        y = lax.reduce_window(y, -jnp.inf, lax.max, (1, 1, 2, 2), (1, 1, 2, 2),
                              'VALID')
        flat = y.reshape(1, -1)
        h = jnp.maximum(jnp.dot(flat, self.W1.T, precision=hi) + self.b1, 0.0)
        out = jnp.dot(h, self.W2.T, precision=hi) + self.b2
        d = 2 ** self.N
        Tm = out.reshape(d, d)
        T = jnp.tril(Tm).astype(jnp.complex64) + 1j * jnp.triu(Tm, 1).T
        T = T + jnp.tril(T, -1).T.conj()                 # chol_h
        Tt = jnp.matmul(T.conj().T, T, precision=hi)
        rho = Tt / jnp.trace(Tt)
        ops_c = jnp.asarray(self.ops.astype(np.complex64))
        p_all = jnp.real(jnp.einsum('ab,kba->k', rho, ops_c, precision=hi))
        return p_all[self.P_idxs]


if __name__ == "__main__":
    key = jax.random.PRNGKey(0)
    k_param, k_x = jax.random.split(key)

    num_qubits = 2
    in_size = 256                                  # crack(256) -> (16, 16) conv plane
    M = tetrahedral_povm()                         # (4, 2, 2) POVM
    P_idxs = np.array([0, 1, 2, 3, 5, 6, 7, 9, 10, 11, 13, 15])  # measured subset

    net = NetConvPallas(in_size, num_qubits, P_idxs, M, k_param)

    x = jax.random.uniform(k_x, (in_size,), jnp.float32)
    x = x / jnp.sum(x)                             # measured probability distribution

    p_real = jax.block_until_ready(net.forward(x))
    p_ref = jax.block_until_ready(net.reference_forward(x))

    # Tolerance relaxed slightly vs. the HIGHEST-precision version: in-kernel dots
    # now run at default (single-pass) MXU precision per the performance review.
    np.testing.assert_allclose(np.asarray(p_real), np.asarray(p_ref),
                               rtol=3e-2, atol=3e-3)
    print("KERNEL_OK")
</pallas_src>

<mosaic_0001>
module attributes {stable_mosaic.version = 11 : i64} {
  func.func @kernel(%arg0: memref<256x9xf32, #tpu.memory_space<vmem>>, %arg1: memref<288x256xf32, #tpu.memory_space<vmem>>, %arg2: memref<1x128xf32, #tpu.memory_space<vmem>>) attributes {dimension_semantics = [], scalar_prefetch = 0 : i64, scratch_operands = 0 : i64, tpu.core_type = #tpu.core_type<tc>} {
    %c0 = arith.constant 0 : index
    %c0_0 = arith.constant 0 : index
    %0 = vector.load %arg0[%c0, %c0_0] : memref<256x9xf32, #tpu.memory_space<vmem>>, vector<256x9xf32>
    %c192 = arith.constant 192 : index
    %c128 = arith.constant 128 : index
    %1 = vector.load %arg1[%c192, %c128] : memref<288x256xf32, #tpu.memory_space<vmem>>, vector<9x10xf32>
    %cst = arith.constant dense<0.000000e+00> : vector<256x10xf32>
    %2 = tpu.matmul %0, %1, %cst {dimension_numbers = #tpu.dot_dimension_numbers<[1], [0], [0], [1], [0, 0, 1, 1], [], []>} : vector<256x9xf32>, vector<9x10xf32>, vector<256x10xf32> -> vector<256x10xf32>
    %c208 = arith.constant 208 : index
    %c128_1 = arith.constant 128 : index
    %3 = vector.load %arg1[%c208, %c128_1] : memref<288x256xf32, #tpu.memory_space<vmem>>, vector<1x10xf32>
    %4 = vector.broadcast %3 : vector<1x10xf32> to vector<256x10xf32>
    %5 = arith.addf %2, %4 : vector<256x10xf32>
    %cst_2 = arith.constant 0.000000e+00 : f32
    %6 = vector.broadcast %cst_2 : f32 to vector<256x10xf32>
    %7 = arith.maximumf %5, %6 : vector<256x10xf32>
    %8 = vector.extract_strided_slice %7 {offsets = [0, 0], sizes = [64, 10], strides = [1, 1]} : vector<256x10xf32> to vector<64x10xf32>
    %9 = vector.extract_strided_slice %7 {offsets = [64, 0], sizes = [64, 10], strides = [1, 1]} : vector<256x10xf32> to vector<64x10xf32>
    %10 = arith.maximumf %8, %9 : vector<64x10xf32>
    %11 = vector.extract_strided_slice %7 {offsets = [128, 0], sizes = [64, 10], strides = [1, 1]} : vector<256x10xf32> to vector<64x10xf32>
    %12 = vector.extract_strided_slice %7 {offsets = [192, 0], sizes = [64, 10], strides = [1, 1]} : vector<256x10xf32> to vector<64x10xf32>
    %13 = arith.maximumf %11, %12 : vector<64x10xf32>
    %14 = arith.maximumf %10, %13 : vector<64x10xf32>
    %c176 = arith.constant 176 : index
    %c128_3 = arith.constant 128 : index
    %15 = vector.load %arg1[%c176, %c128_3] : memref<288x256xf32, #tpu.memory_space<vmem>>, vector<10x80xf32>
    %cst_4 = arith.constant dense<0.000000e+00> : vector<64x80xf32>
    %16 = tpu.matmul %14, %15, %cst_4 {dimension_numbers = #tpu.dot_dimension_numbers<[1], [0], [0], [1], [0, 0, 1, 1], [], []>} : vector<64x10xf32>, vector<10x80xf32>, vector<64x80xf32> -> vector<64x80xf32>
    %c112 = arith.constant 112 : index
    %c128_5 = arith.constant 128 : index
    %17 = vector.load %arg1[%c112, %c128_5] : memref<288x256xf32, #tpu.memory_space<vmem>>, vector<64x80xf32>
    %18 = arith.mulf %16, %17 : vector<64x80xf32>
    %cst_6 = arith.constant dense<0.000000e+00> : vector<80xf32>
    %19 = vector.multi_reduction <add>, %18, %cst_6 [0] : vector<64x80xf32> to vector<80xf32>
    %20 = vector.shape_cast %19 : vector<80xf32> to vector<1x80xf32>
    %c32 = arith.constant 32 : index
    %c128_7 = arith.constant 128 : index
    %21 = vector.load %arg1[%c32, %c128_7] : memref<288x256xf32, #tpu.memory_space<vmem>>, vector<80x8xf32>
    %cst_8 = arith.constant dense<0.000000e+00> : vector<1x8xf32>
    %22 = tpu.matmul %20, %21, %cst_8 {dimension_numbers = #tpu.dot_dimension_numbers<[1], [0], [0], [1], [0, 0, 1, 1], [], []>} : vector<1x80xf32>, vector<80x8xf32>, vector<1x8xf32> -> vector<1x8xf32>
    %c216 = arith.constant 216 : index
    %c128_9 = arith.constant 128 : index
    %23 = vector.load %arg1[%c216, %c128_9] : memref<288x256xf32, #tpu.memory_space<vmem>>, vector<1x8xf32>
    %24 = arith.addf %22, %23 : vector<1x8xf32>
    %cst_10 = arith.constant 0.000000e+00 : f32
    %25 = vector.broadcast %cst_10 : f32 to vector<1x8xf32>
    %26 = arith.maximumf %24, %25 : vector<1x8xf32>
    %c0_11 = arith.constant 0 : index
    %c0_12 = arith.constant 0 : index
    %27 = vector.load %arg1[%c0_11, %c0_12] : memref<288x256xf32, #tpu.memory_space<vmem>>, vector<8x256xf32>
    %cst_13 = arith.constant dense<0.000000e+00> : vector<1x256xf32>
    %28 = tpu.matmul %26, %27, %cst_13 {dimension_numbers = #tpu.dot_dimension_numbers<[1], [0], [0], [1], [0, 0, 1, 1], [], []>} : vector<1x8xf32>, vector<8x256xf32>, vector<1x256xf32> -> vector<1x256xf32>
    %c16 = arith.constant 16 : index
    %c0_14 = arith.constant 0 : index
    %29 = vector.load %arg1[%c16, %c0_14] : memref<288x256xf32, #tpu.memory_space<vmem>>, vector<1x256xf32>
    %30 = arith.addf %28, %29 : vector<1x256xf32>
    %c8 = arith.constant 8 : index
    %c0_15 = arith.constant 0 : index
    %31 = vector.load %arg1[%c8, %c0_15] : memref<288x256xf32, #tpu.memory_space<vmem>>, vector<8x256xf32>
    %cst_16 = arith.constant dense<0.000000e+00> : vector<1x256xf32>
    %32 = tpu.matmul %26, %31, %cst_16 {dimension_numbers = #tpu.dot_dimension_numbers<[1], [0], [0], [1], [0, 0, 1, 1], [], []>} : vector<1x8xf32>, vector<8x256xf32>, vector<1x256xf32> -> vector<1x256xf32>
    %c24 = arith.constant 24 : index
    %c0_17 = arith.constant 0 : index
    %33 = vector.load %arg1[%c24, %c0_17] : memref<288x256xf32, #tpu.memory_space<vmem>>, vector<1x256xf32>
    %34 = arith.addf %32, %33 : vector<1x256xf32>
    %35 = arith.mulf %30, %34 : vector<1x256xf32>
    %c32_18 = arith.constant 32 : index
    %c0_19 = arith.constant 0 : index
    %36 = vector.load %arg1[%c32_18, %c0_19] : memref<288x256xf32, #tpu.memory_space<vmem>>, vector<256x128xf32>
    %cst_20 = arith.constant dense<0.000000e+00> : vector<1x128xf32>
    %37 = tpu.matmul %35, %36, %cst_20 {dimension_numbers = #tpu.dot_dimension_numbers<[1], [0], [0], [1], [0, 0, 1, 1], [], []>} : vector<1x256xf32>, vector<256x128xf32>, vector<1x128xf32> -> vector<1x128xf32>
    %38 = vector.extract_strided_slice %37 {offsets = [0, 127], sizes = [1, 1], strides = [1, 1]} : vector<1x128xf32> to vector<1x1xf32>
    %39 = tpu.reciprocal %38 {approx = true} : vector<1x1xf32> -> vector<1x1xf32>
    %40 = vector.broadcast %39 : vector<1x1xf32> to vector<1x128xf32>
    %41 = arith.mulf %37, %40 : vector<1x128xf32>
    %c0_21 = arith.constant 0 : index
    %c0_22 = arith.constant 0 : index
    %42 = vector.load %arg2[%c0_21, %c0_22] : memref<1x128xf32, #tpu.memory_space<vmem>>, vector<1x128xf32>
    tpu.vector_store %arg2[%c0_21, %c0_22], %41 {strides = array<i32>} : memref<1x128xf32, #tpu.memory_space<vmem>>, vector<1x128xf32>,
    return
  }
}

</mosaic_0001>

<llo_original>
// kernel: _forward_impl.1
$region0: #{_forward_impl.1}
  #allocation0 [shape = 'u32[]', space=smem, size = 0x4, offset = 0x4, fixed_abs, tag = 'smem constant byte address 0x4 - core index']
  #allocation1 [shape = 'u32[72,128]{1,0:T(1,128)}', space=vmem, size = 0x9000, scoped, tag = 'internal scratch']
  %s0 = inlined_call_operand.vmem [shape: f32[256,9], index: 0, kind: input, shape index: {}]
  %s1 = inlined_call_operand.vmem [shape: f32[288,256], index: 1, kind: input, shape index: {}]
  %s2 = inlined_call_operand.vmem [shape: f32[1,128], index: 2, kind: output, shape index: {}]
  %s3 = sld [smem:[#allocation0]]
  $region18: #{_forward_impl.1} parent=0
    _
  %s5 = ssub.s32 1, %s3
  %s6 = scalar_select 0, %s5, %s3
  // Predicated region
  $region2: #{_forward_impl.1} parent=0 // pred_check
    _
  $region3: #{_forward_impl.1} parent=0 // pred_check_branch
    %8 = sbr.rel (0) target = $region5
  $region4: #{_forward_impl.1} parent=0 // pred_region
    _
  $region5: #{_forward_impl.1} parent=0 // pred_fallthru
    _
  // Predicated region
  $region6: #{_forward_impl.1} parent=0 // pred_check
    _
  $region7: #{_forward_impl.1} parent=0 // pred_check_branch
    %10 = sbr.rel (0) target = $region9
  $region8: #{_forward_impl.1} parent=0 // pred_region
    _
  $region9: #{_forward_impl.1} parent=0 // pred_fallthru
    _
  %v11 = vld [vmem:[%s0] sm:$0xff]
  %v12 = vld [vmem:[%s0 + $0x8] sm:$0xff]
  %v13 = vld [vmem:[%s0 + $0x10] sm:$0xff]
  %v14 = vld [vmem:[%s0 + $0x18] sm:$0xff]
  %v15 = vld [vmem:[%s0 + $0x20] sm:$0xff]
  %v16 = vld [vmem:[%s0 + $0x28] sm:$0xff]
  %v17 = vld [vmem:[%s0 + $0x30] sm:$0xff]
  %v18 = vld [vmem:[%s0 + $0x38] sm:$0xff]
  %v19 = vld [vmem:[%s0 + $0x40] sm:$0xff]
  %v20 = vld [vmem:[%s0 + $0x48] sm:$0xff]
  %v21 = vld [vmem:[%s0 + $0x50] sm:$0xff]
  %v22 = vld [vmem:[%s0 + $0x58] sm:$0xff]
  %v23 = vld [vmem:[%s0 + $0x60] sm:$0xff]
  %v24 = vld [vmem:[%s0 + $0x68] sm:$0xff]
  %v25 = vld [vmem:[%s0 + $0x70] sm:$0xff]
  %v26 = vld [vmem:[%s0 + $0x78] sm:$0xff]
  %v27 = vld [vmem:[%s0 + $0x80] sm:$0xff]
  %v28 = vld [vmem:[%s0 + $0x88] sm:$0xff]
  %v29 = vld [vmem:[%s0 + $0x90] sm:$0xff]
  %v30 = vld [vmem:[%s0 + $0x98] sm:$0xff]
  %v31 = vld [vmem:[%s0 + $0xa0] sm:$0xff]
  %v32 = vld [vmem:[%s0 + $0xa8] sm:$0xff]
  %v33 = vld [vmem:[%s0 + $0xb0] sm:$0xff]
  %v34 = vld [vmem:[%s0 + $0xb8] sm:$0xff]
  %v35 = vld [vmem:[%s0 + $0xc0] sm:$0xff]
  %v36 = vld [vmem:[%s0 + $0xc8] sm:$0xff]
  %v37 = vld [vmem:[%s0 + $0xd0] sm:$0xff]
  %v38 = vld [vmem:[%s0 + $0xd8] sm:$0xff]
  %v39 = vld [vmem:[%s0 + $0xe0] sm:$0xff]
  %v40 = vld [vmem:[%s0 + $0xe8] sm:$0xff]
  %v41 = vld [vmem:[%s0 + $0xf0] sm:$0xff]
  %v42 = vld [vmem:[%s0 + $0xf8] sm:$0xff]
  %v43 = vld [vmem:[%s1 + $0x188] sm:$0xff]
  %v44 = vld [vmem:[%s1 + $0x198] sm:$0x1]
  %v45 = vld [vmem:[%s1 + $0x1a8] ss:$0 sm:$0xff]
  %vm46 = vcmask 72704
  %v48 = vsel %vm46, %v11, 0
  %v51 = vsel %vm46, %v12, 0
  %v54 = vsel %vm46, %v13, 0
  %v57 = vsel %vm46, %v14, 0
  %v60 = vsel %vm46, %v15, 0
  %v63 = vsel %vm46, %v16, 0
  %v66 = vsel %vm46, %v17, 0
  %v69 = vsel %vm46, %v18, 0
  %v72 = vsel %vm46, %v19, 0
  %v75 = vsel %vm46, %v20, 0
  %v78 = vsel %vm46, %v21, 0
  %v81 = vsel %vm46, %v22, 0
  %v84 = vsel %vm46, %v23, 0
  %v87 = vsel %vm46, %v24, 0
  %v90 = vsel %vm46, %v25, 0
  %v93 = vsel %vm46, %v26, 0
  %v96 = vsel %vm46, %v27, 0
  %v99 = vsel %vm46, %v28, 0
  %v102 = vsel %vm46, %v29, 0
  %v105 = vsel %vm46, %v30, 0
  %v108 = vsel %vm46, %v31, 0
  %v111 = vsel %vm46, %v32, 0
  %v114 = vsel %vm46, %v33, 0
  %v117 = vsel %vm46, %v34, 0
  %v120 = vsel %vm46, %v35, 0
  %v123 = vsel %vm46, %v36, 0
  %v126 = vsel %vm46, %v37, 0
  %v129 = vsel %vm46, %v38, 0
  %v132 = vsel %vm46, %v39, 0
  %v135 = vsel %vm46, %v40, 0
  %v138 = vsel %vm46, %v41, 0
  %v141 = vsel %vm46, %v42, 0
  %vm143 = vcmask 1040384
  %v145 = vsel %vm143, %v44, 0
  %147 = vmatpush.msra.mxu0 0.0
  %148 = vmatpush.msra.mxu0 0.0
  %149 = vmatpush.msra.mxu0 0.0
  %150 = vmatpush.msra.mxu0 0.0
  %151 = vmatpush.msra.mxu0 0.0
  %152 = vmatpush.msra.mxu0 0.0
  %153 = vmatpush.msra.mxu0 0.0
  %154 = vmatpush.msra.mxu0 0.0
  %155 = vmatpush.msra.mxu0 0.0
  %156 = vmatpush.msra.mxu0 0.0
  %157 = vmatpush.msra.mxu0 0.0
  %158 = vmatpush.msra.mxu0 0.0
  %159 = vmatpush.msra.mxu0 0.0
  %160 = vmatpush.msra.mxu0 0.0
  %161 = vmatpush.msra.mxu0 %v145
  %162 = vmatpush.msra.mxu0 %v43
  %163 = vmatmul.f32.gmra.mxu0 %v48
  %v164 = vpop.f32.mrf.mxu0
  %v165 = vadd.f32 %v45, %v164
  %166 = vmatmul.f32.gmra.mxu0 %v51
  %v167 = vpop.f32.mrf.mxu0
  %v168 = vadd.f32 %v45, %v167
  %169 = vmatmul.f32.gmra.mxu0 %v54
  %v170 = vpop.f32.mrf.mxu0
  %v171 = vadd.f32 %v45, %v170
  %172 = vmatmul.f32.gmra.mxu0 %v57
  %v173 = vpop.f32.mrf.mxu0
  %v174 = vadd.f32 %v45, %v173
  %175 = vmatmul.f32.gmra.mxu0 %v60
  %v176 = vpop.f32.mrf.mxu0
  %v177 = vadd.f32 %v45, %v176
  %178 = vmatmul.f32.gmra.mxu0 %v63
  %v179 = vpop.f32.mrf.mxu0
  %v180 = vadd.f32 %v45, %v179
  %181 = vmatmul.f32.gmra.mxu0 %v66
  %v182 = vpop.f32.mrf.mxu0
  %v183 = vadd.f32 %v45, %v182
  %184 = vmatmul.f32.gmra.mxu0 %v69
  %v185 = vpop.f32.mrf.mxu0
  %v186 = vadd.f32 %v45, %v185
  %187 = vmatmul.f32.gmra.mxu0 %v72
  %v188 = vpop.f32.mrf.mxu0
  %v189 = vadd.f32 %v45, %v188
  %190 = vmatmul.f32.gmra.mxu0 %v75
  %v191 = vpop.f32.mrf.mxu0
  %v192 = vadd.f32 %v45, %v191
  %193 = vmatmul.f32.gmra.mxu0 %v78
  %v194 = vpop.f32.mrf.mxu0
  %v195 = vadd.f32 %v45, %v194
  %196 = vmatmul.f32.gmra.mxu0 %v81
  %v197 = vpop.f32.mrf.mxu0
  %v198 = vadd.f32 %v45, %v197
  %199 = vmatmul.f32.gmra.mxu0 %v84
  %v200 = vpop.f32.mrf.mxu0
  %v201 = vadd.f32 %v45, %v200
  %202 = vmatmul.f32.gmra.mxu0 %v87
  %v203 = vpop.f32.mrf.mxu0
  %v204 = vadd.f32 %v45, %v203
  %205 = vmatmul.f32.gmra.mxu0 %v90
  %v206 = vpop.f32.mrf.mxu0
  %v207 = vadd.f32 %v45, %v206
  %208 = vmatmul.f32.gmra.mxu0 %v93
  %v209 = vpop.f32.mrf.mxu0
  %v210 = vadd.f32 %v45, %v209
  %211 = vmatmul.f32.gmra.mxu0 %v96
  %v212 = vpop.f32.mrf.mxu0
  %v213 = vadd.f32 %v45, %v212
  %214 = vmatmul.f32.gmra.mxu0 %v99
  %v215 = vpop.f32.mrf.mxu0
  %v216 = vadd.f32 %v45, %v215
  %217 = vmatmul.f32.gmra.mxu0 %v102
  %v218 = vpop.f32.mrf.mxu0
  %v219 = vadd.f32 %v45, %v218
  %220 = vmatmul.f32.gmra.mxu0 %v105
  %v221 = vpop.f32.mrf.mxu0
  %v222 = vadd.f32 %v45, %v221
  %223 = vmatmul.f32.gmra.mxu0 %v108
  %v224 = vpop.f32.mrf.mxu0
  %v225 = vadd.f32 %v45, %v224
  %226 = vmatmul.f32.gmra.mxu0 %v111
  %v227 = vpop.f32.mrf.mxu0
  %v228 = vadd.f32 %v45, %v227
  %229 = vmatmul.f32.gmra.mxu0 %v114
  %v230 = vpop.f32.mrf.mxu0
  %v231 = vadd.f32 %v45, %v230
  %232 = vmatmul.f32.gmra.mxu0 %v117
  %v233 = vpop.f32.mrf.mxu0
  %v234 = vadd.f32 %v45, %v233
  %235 = vmatmul.f32.gmra.mxu0 %v120
  %v236 = vpop.f32.mrf.mxu0
  %v237 = vadd.f32 %v45, %v236
  %238 = vmatmul.f32.gmra.mxu0 %v123
  %v239 = vpop.f32.mrf.mxu0
  %v240 = vadd.f32 %v45, %v239
  %241 = vmatmul.f32.gmra.mxu0 %v126
  %v242 = vpop.f32.mrf.mxu0
  %v243 = vadd.f32 %v45, %v242
  %244 = vmatmul.f32.gmra.mxu0 %v129
  %v245 = vpop.f32.mrf.mxu0
  %v246 = vadd.f32 %v45, %v245
  %247 = vmatmul.f32.gmra.mxu0 %v132
  %v248 = vpop.f32.mrf.mxu0
  %v249 = vadd.f32 %v45, %v248
  %250 = vmatmul.f32.gmra.mxu0 %v135
  %v251 = vpop.f32.mrf.mxu0
  %v252 = vadd.f32 %v45, %v251
  %253 = vmatmul.f32.gmra.mxu0 %v138
  %v254 = vpop.f32.mrf.mxu0
  %v255 = vadd.f32 %v45, %v254
  %256 = vmatmul.f32.gmra.mxu0 %v141
  %v257 = vpop.f32.mrf.mxu0
  %v258 = vadd.f32 %v45, %v257
  %259 = vdwg.mxu0
  %v260 = vmax.f32 %v165, 0.0
  %v261 = vmax.f32 %v168, 0.0
  %v262 = vmax.f32 %v171, 0.0
  %v263 = vmax.f32 %v174, 0.0
  %v264 = vmax.f32 %v177, 0.0
  %v265 = vmax.f32 %v180, 0.0
  %v266 = vmax.f32 %v183, 0.0
  %v267 = vmax.f32 %v186, 0.0
  %v268 = vmax.f32 %v189, 0.0
  %v269 = vmax.f32 %v192, 0.0
  %v270 = vmax.f32 %v195, 0.0
  %v271 = vmax.f32 %v198, 0.0
  %v272 = vmax.f32 %v201, 0.0
  %v273 = vmax.f32 %v204, 0.0
  %v274 = vmax.f32 %v207, 0.0
  %v275 = vmax.f32 %v210, 0.0
  %v276 = vmax.f32 %v213, 0.0
  %v277 = vmax.f32 %v216, 0.0
  %v278 = vmax.f32 %v219, 0.0
  %v279 = vmax.f32 %v222, 0.0
  %v280 = vmax.f32 %v225, 0.0
  %v281 = vmax.f32 %v228, 0.0
  %v282 = vmax.f32 %v231, 0.0
  %v283 = vmax.f32 %v234, 0.0
  %v284 = vmax.f32 %v237, 0.0
  %v285 = vmax.f32 %v240, 0.0
  %v286 = vmax.f32 %v243, 0.0
  %v287 = vmax.f32 %v246, 0.0
  %v288 = vmax.f32 %v249, 0.0
  %v289 = vmax.f32 %v252, 0.0
  %v290 = vmax.f32 %v255, 0.0
  %v291 = vmax.f32 %v258, 0.0
  %v292 = vmax.f32 %v260, %v268
  %v293 = vmax.f32 %v261, %v269
  %v294 = vmax.f32 %v262, %v270
  %v295 = vmax.f32 %v263, %v271
  %v296 = vmax.f32 %v264, %v272
  %v297 = vmax.f32 %v265, %v273
  %v298 = vmax.f32 %v266, %v274
  %v299 = vmax.f32 %v267, %v275
  %v300 = vmax.f32 %v276, %v284
  %v301 = vmax.f32 %v277, %v285
  %v302 = vmax.f32 %v278, %v286
  %v303 = vmax.f32 %v279, %v287
  %v304 = vmax.f32 %v280, %v288
  %v305 = vmax.f32 %v281, %v289
  %v306 = vmax.f32 %v282, %v290
  %v307 = vmax.f32 %v283, %v291
  %v308 = vmax.f32 %v292, %v300
  %v309 = vmax.f32 %v293, %v301
  %v310 = vmax.f32 %v294, %v302
  %v311 = vmax.f32 %v295, %v303
  %v312 = vmax.f32 %v296, %v304
  %v313 = vmax.f32 %v297, %v305
  %v314 = vmax.f32 %v298, %v306
  %v315 = vmax.f32 %v299, %v307
  %v316 = vld [vmem:[%s1 + $0x168] sm:$0xff]
  %v317 = vld [vmem:[%s1 + $0x178] sm:$0x3]
  %vm318 = vcmask 80896
  %v320 = vsel %vm318, %v308, 0
  %v323 = vsel %vm318, %v309, 0
  %v326 = vsel %vm318, %v310, 0
  %v329 = vsel %vm318, %v311, 0
  %v332 = vsel %vm318, %v312, 0
  %v335 = vsel %vm318, %v313, 0
  %v338 = vsel %vm318, %v314, 0
  %v341 = vsel %vm318, %v315, 0
  %vm343 = vcmask 1041408
  %v345 = vsel %vm343, %v317, 0
  %347 = vmatpush.msra.mxu0 0.0
  %348 = vmatpush.msra.mxu0 0.0
  %349 = vmatpush.msra.mxu0 0.0
  %350 = vmatpush.msra.mxu0 0.0
  %351 = vmatpush.msra.mxu0 0.0
  %352 = vmatpush.msra.mxu0 0.0
  %353 = vmatpush.msra.mxu0 0.0
  %354 = vmatpush.msra.mxu0 0.0
  %355 = vmatpush.msra.mxu0 0.0
  %356 = vmatpush.msra.mxu0 0.0
  %357 = vmatpush.msra.mxu0 0.0
  %358 = vmatpush.msra.mxu0 0.0
  %359 = vmatpush.msra.mxu0 0.0
  %360 = vmatpush.msra.mxu0 0.0
  %361 = vmatpush.msra.mxu0 %v345
  %362 = vmatpush.msra.mxu0 %v316
  %363 = vmatmul.f32.gmra.mxu0 %v320
  %v364 = vpop.f32.mrf.mxu0
  %v365 = vadd.f32 0.0, %v364
  %366 = vmatmul.f32.gmra.mxu0 %v323
  %v367 = vpop.f32.mrf.mxu0
  %v368 = vadd.f32 0.0, %v367
  %369 = vmatmul.f32.gmra.mxu0 %v326
  %v370 = vpop.f32.mrf.mxu0
  %v371 = vadd.f32 0.0, %v370
  %372 = vmatmul.f32.gmra.mxu0 %v329
  %v373 = vpop.f32.mrf.mxu0
  %v374 = vadd.f32 0.0, %v373
  %375 = vmatmul.f32.gmra.mxu0 %v332
  %v376 = vpop.f32.mrf.mxu0
  %v377 = vadd.f32 0.0, %v376
  %378 = vmatmul.f32.gmra.mxu0 %v335
  %v379 = vpop.f32.mrf.mxu0
  %v380 = vadd.f32 0.0, %v379
  %381 = vmatmul.f32.gmra.mxu0 %v338
  %v382 = vpop.f32.mrf.mxu0
  %v383 = vadd.f32 0.0, %v382
  %384 = vmatmul.f32.gmra.mxu0 %v341
  %v385 = vpop.f32.mrf.mxu0
  %v386 = vadd.f32 0.0, %v385
  %387 = vdwg.mxu0
  %v388 = vld [vmem:[%s1 + $0xe8] sm:$0xff]
  %v389 = vld [vmem:[%s1 + $0xf8] sm:$0xff]
  %v390 = vld [vmem:[%s1 + $0x108] sm:$0xff]
  %v391 = vld [vmem:[%s1 + $0x118] sm:$0xff]
  %v392 = vld [vmem:[%s1 + $0x128] sm:$0xff]
  %v393 = vld [vmem:[%s1 + $0x138] sm:$0xff]
  %v394 = vld [vmem:[%s1 + $0x148] sm:$0xff]
  %v395 = vld [vmem:[%s1 + $0x158] sm:$0xff]
  %v396 = vmul.f32 %v365, %v388
  %v397 = vmul.f32 %v368, %v389
  %v398 = vmul.f32 %v371, %v390
  %v399 = vmul.f32 %v374, %v391
  %v400 = vmul.f32 %v377, %v392
  %v401 = vmul.f32 %v380, %v393
  %v402 = vmul.f32 %v383, %v394
  %v403 = vmul.f32 %v386, %v395
  %vm404 = vcmask 654336
  %v405 = vsel %vm404, %v396, 0.0
  %v406 = vsel %vm404, %v397, 0.0
  %v407 = vadd.f32 %v405, %v406
  %v408 = vsel %vm404, %v398, 0.0
  %v409 = vadd.f32 %v407, %v408
  %v410 = vsel %vm404, %v399, 0.0
  %v411 = vadd.f32 %v409, %v410
  %v412 = vsel %vm404, %v400, 0.0
  %v413 = vadd.f32 %v411, %v412
  %v414 = vsel %vm404, %v401, 0.0
  %v415 = vadd.f32 %v413, %v414
  %v416 = vsel %vm404, %v402, 0.0
  %v417 = vadd.f32 %v415, %v416
  %v418 = vsel %vm404, %v403, 0.0
  %v419 = vadd.f32 %v417, %v418
  %v420 = vrot.slane %v419, 4
  %v421 = vadd.f32 %v419, %v420
  %v422 = vrot.slane %v421, 2
  %v423 = vadd.f32 %v421, %v422
  %v424 = vrot.slane %v423, 1
  %v425 = vadd.f32 %v423, %v424
  %v426 = vld [vmem:[%s1 + $0x48] sm:$0xff]
  %v427 = vld [vmem:[%s1 + $0x58] sm:$0xff]
  %v428 = vld [vmem:[%s1 + $0x68] sm:$0xff]
  %v429 = vld [vmem:[%s1 + $0x78] sm:$0xff]
  %v430 = vld [vmem:[%s1 + $0x88] sm:$0xff]
  %v431 = vld [vmem:[%s1 + $0x98] sm:$0xff]
  %v432 = vld [vmem:[%s1 + $0xa8] sm:$0xff]
  %v433 = vld [vmem:[%s1 + $0xb8] sm:$0xff]
  %v434 = vld [vmem:[%s1 + $0xc8] sm:$0xff]
  %v435 = vld [vmem:[%s1 + $0xd8] sm:$0xff]
  %v436 = vld [vmem:[%s1 + $0x1b8] ss:$0 sm:$0xff]
  %v438 = vsel %vm404, %v425, 0
  %440 = vmatpush.msra.mxu0 0.0
  %441 = vmatpush.msra.mxu0 0.0
  %442 = vmatpush.msra.mxu0 0.0
  %443 = vmatpush.msra.mxu0 0.0
  %444 = vmatpush.msra.mxu0 0.0
  %445 = vmatpush.msra.mxu0 0.0
  %446 = vmatpush.msra.mxu0 %v435
  %447 = vmatpush.msra.mxu0 %v434
  %448 = vmatpush.msra.mxu0 %v433
  %449 = vmatpush.msra.mxu0 %v432
  %450 = vmatpush.msra.mxu0 %v431
  %451 = vmatpush.msra.mxu0 %v430
  %452 = vmatpush.msra.mxu0 %v429
  %453 = vmatpush.msra.mxu0 %v428
  %454 = vmatpush.msra.mxu0 %v427
  %455 = vmatpush.msra.mxu0 %v426
  %456 = vmatmul.f32.gmra.mxu0 %v438
  %v457 = vpop.f32.mrf.mxu0
  %v458 = vadd.f32 %v436, %v457
  %459 = vdwg.mxu0
  %v460 = vmax.f32 %v458, 0.0
  %v461 = vld [vmem:[%s1] sm:$0xff]
  %v462 = vld [vmem:[%s1 + $0x8] sm:$0xff]
  %s463 = scalar_lea.vmem %s1, 32
  %v464 = vld [vmem:[%s463] ss:$8 sm:$0x3]
  %v466 = vperm.slane %v464, 0
  %v467 = vperm.slane %v464, 1
  %vm470 = vcmask 64512
  %v472 = vsel %vm470, %v460, 0
  %474 = vmatpush.msra.mxu0 0.0
  %475 = vmatpush.msra.mxu0 0.0
  %476 = vmatpush.msra.mxu0 0.0
  %477 = vmatpush.msra.mxu0 0.0
  %478 = vmatpush.msra.mxu0 0.0
  %479 = vmatpush.msra.mxu0 0.0
  %480 = vmatpush.msra.mxu0 0.0
  %481 = vmatpush.msra.mxu0 0.0
  %482 = vmatpush.msra.mxu0 0.0
  %483 = vmatpush.msra.mxu0 0.0
  %484 = vmatpush.msra.mxu0 0.0
  %485 = vmatpush.msra.mxu0 0.0
  %486 = vmatpush.msra.mxu0 0.0
  %487 = vmatpush.msra.mxu0 0.0
  %488 = vmatpush.msra.mxu0 0.0
  %489 = vmatpush.msra.mxu0 %v461
  %490 = vmatmul.f32.gmra.mxu0 %v472
  %v491 = vpop.f32.mrf.mxu0
  %v492 = vadd.f32 %v466, %v491
  %493 = vdwg.mxu0
  %494 = vmatpush.msra.mxu0 0.0
  %495 = vmatpush.msra.mxu0 0.0
  %496 = vmatpush.msra.mxu0 0.0
  %497 = vmatpush.msra.mxu0 0.0
  %498 = vmatpush.msra.mxu0 0.0
  %499 = vmatpush.msra.mxu0 0.0
  %500 = vmatpush.msra.mxu0 0.0
  %501 = vmatpush.msra.mxu0 0.0
  %502 = vmatpush.msra.mxu0 0.0
  %503 = vmatpush.msra.mxu0 0.0
  %504 = vmatpush.msra.mxu0 0.0
  %505 = vmatpush.msra.mxu0 0.0
  %506 = vmatpush.msra.mxu0 0.0
  %507 = vmatpush.msra.mxu0 0.0
  %508 = vmatpush.msra.mxu0 0.0
  %509 = vmatpush.msra.mxu0 %v462
  %510 = vmatmul.f32.gmra.mxu0 %v472
  %v511 = vpop.f32.mrf.mxu0
  %v512 = vadd.f32 %v467, %v511
  %513 = vdwg.mxu0
  %v514 = vld [vmem:[%s1 + $0x10] sm:$0xff]
  %v515 = vld [vmem:[%s1 + $0x18] sm:$0xff]
  %s516 = scalar_lea.vmem %s1, 48
  %v517 = vld [vmem:[%s516] ss:$8 sm:$0x3]
  %v519 = vperm.slane %v517, 0
  %v520 = vperm.slane %v517, 1
  %523 = vmatpush.msra.mxu0 0.0
  %524 = vmatpush.msra.mxu0 0.0
  %525 = vmatpush.msra.mxu0 0.0
  %526 = vmatpush.msra.mxu0 0.0
  %527 = vmatpush.msra.mxu0 0.0
  %528 = vmatpush.msra.mxu0 0.0
  %529 = vmatpush.msra.mxu0 0.0
  %530 = vmatpush.msra.mxu0 0.0
  %531 = vmatpush.msra.mxu0 0.0
  %532 = vmatpush.msra.mxu0 0.0
  %533 = vmatpush.msra.mxu0 0.0
  %534 = vmatpush.msra.mxu0 0.0
  %535 = vmatpush.msra.mxu0 0.0
  %536 = vmatpush.msra.mxu0 0.0
  %537 = vmatpush.msra.mxu0 0.0
  %538 = vmatpush.msra.mxu0 %v514
  %539 = vmatmul.f32.gmra.mxu0 %v472
  %v540 = vpop.f32.mrf.mxu0
  %v541 = vadd.f32 %v519, %v540
  %542 = vdwg.mxu0
  %543 = vmatpush.msra.mxu0 0.0
  %544 = vmatpush.msra.mxu0 0.0
  %545 = vmatpush.msra.mxu0 0.0
  %546 = vmatpush.msra.mxu0 0.0
  %547 = vmatpush.msra.mxu0 0.0
  %548 = vmatpush.msra.mxu0 0.0
  %549 = vmatpush.msra.mxu0 0.0
  %550 = vmatpush.msra.mxu0 0.0
  %551 = vmatpush.msra.mxu0 0.0
  %552 = vmatpush.msra.mxu0 0.0
  %553 = vmatpush.msra.mxu0 0.0
  %554 = vmatpush.msra.mxu0 0.0
  %555 = vmatpush.msra.mxu0 0.0
  %556 = vmatpush.msra.mxu0 0.0
  %557 = vmatpush.msra.mxu0 0.0
  %558 = vmatpush.msra.mxu0 %v515
  %559 = vmatmul.f32.gmra.mxu0 %v472
  %v560 = vpop.f32.mrf.mxu0
  %v561 = vadd.f32 %v520, %v560
  %562 = vdwg.mxu0
  %v563 = vmul.f32 %v492, %v541
  %v564 = vmul.f32 %v512, %v561
  %v565 = vld [vmem:[%s1 + $0x40] sm:$0xff]
  %v566 = vld [vmem:[%s1 + $0x50] sm:$0xff]
  %v567 = vld [vmem:[%s1 + $0x60] sm:$0xff]
  %v568 = vld [vmem:[%s1 + $0x70] sm:$0xff]
  %v569 = vld [vmem:[%s1 + $0x80] sm:$0xff]
  %v570 = vld [vmem:[%s1 + $0x90] sm:$0xff]
  %v571 = vld [vmem:[%s1 + $0xa0] sm:$0xff]
  %v572 = vld [vmem:[%s1 + $0xb0] sm:$0xff]
  %v573 = vld [vmem:[%s1 + $0xc0] sm:$0xff]
  %v574 = vld [vmem:[%s1 + $0xd0] sm:$0xff]
  %v575 = vld [vmem:[%s1 + $0xe0] sm:$0xff]
  %v576 = vld [vmem:[%s1 + $0xf0] sm:$0xff]
  %v577 = vld [vmem:[%s1 + $0x100] sm:$0xff]
  %v578 = vld [vmem:[%s1 + $0x110] sm:$0xff]
  %v579 = vld [vmem:[%s1 + $0x120] sm:$0xff]
  %v580 = vld [vmem:[%s1 + $0x130] sm:$0xff]
  %v581 = vld [vmem:[%s1 + $0x140] sm:$0xff]
  %v582 = vld [vmem:[%s1 + $0x150] sm:$0xff]
  %v583 = vld [vmem:[%s1 + $0x160] sm:$0xff]
  %v584 = vld [vmem:[%s1 + $0x170] sm:$0xff]
  %v585 = vld [vmem:[%s1 + $0x180] sm:$0xff]
  %v586 = vld [vmem:[%s1 + $0x190] sm:$0xff]
  %v587 = vld [vmem:[%s1 + $0x1a0] sm:$0xff]
  %v588 = vld [vmem:[%s1 + $0x1b0] sm:$0xff]
  %v589 = vld [vmem:[%s1 + $0x1c0] sm:$0xff]
  %v590 = vld [vmem:[%s1 + $0x1d0] sm:$0xff]
  %v591 = vld [vmem:[%s1 + $0x1e0] sm:$0xff]
  %v592 = vld [vmem:[%s1 + $0x1f0] sm:$0xff]
  %v593 = vld [vmem:[%s1 + $0x200] sm:$0xff]
  %v594 = vld [vmem:[%s1 + $0x210] sm:$0xff]
  %v595 = vld [vmem:[%s1 + $0x220] sm:$0xff]
  %v596 = vld [vmem:[%s1 + $0x230] sm:$0xff]
  %597 = vmatpush.msra.mxu0 %v580
  %598 = vmatpush.msra.mxu0 %v579
  %599 = vmatpush.msra.mxu0 %v578
  %600 = vmatpush.msra.mxu0 %v577
  %601 = vmatpush.msra.mxu0 %v576
  %602 = vmatpush.msra.mxu0 %v575
  %603 = vmatpush.msra.mxu0 %v574
  %604 = vmatpush.msra.mxu0 %v573
  %605 = vmatpush.msra.mxu0 %v572
  %606 = vmatpush.msra.mxu0 %v571
  %607 = vmatpush.msra.mxu0 %v570
  %608 = vmatpush.msra.mxu0 %v569
  %609 = vmatpush.msra.mxu0 %v568
  %610 = vmatpush.msra.mxu0 %v567
  %611 = vmatpush.msra.mxu0 %v566
  %612 = vmatpush.msra.mxu0 %v565
  %613 = vmatmul.f32.gmra.mxu0 %v563
  %v614 = vpop.f32.mrf.mxu0
  %v615 = vadd.f32 0.0, %v614
  %616 = vdwg.mxu0
  %617 = vmatpush.msra.mxu0 %v596
  %618 = vmatpush.msra.mxu0 %v595
  %619 = vmatpush.msra.mxu0 %v594
  %620 = vmatpush.msra.mxu0 %v593
  %621 = vmatpush.msra.mxu0 %v592
  %622 = vmatpush.msra.mxu0 %v591
  %623 = vmatpush.msra.mxu0 %v590
  %624 = vmatpush.msra.mxu0 %v589
  %625 = vmatpush.msra.mxu0 %v588
  %626 = vmatpush.msra.mxu0 %v587
  %627 = vmatpush.msra.mxu0 %v586
  %628 = vmatpush.msra.mxu0 %v585
  %629 = vmatpush.msra.mxu0 %v584
  %630 = vmatpush.msra.mxu0 %v583
  %631 = vmatpush.msra.mxu0 %v582
  %632 = vmatpush.msra.mxu0 %v581
  %633 = vmatmul.f32.gmra.mxu0 %v564
  %v634 = vpop.f32.mrf.mxu0
  %v635 = vadd.f32 %v615, %v634
  %636 = vdwg.mxu0
  %v637 = vrcp.pop %v635
  %639 = vset.pattern.permute.xlu0 127
  %640 = vperm.xlu0 %639, %v637
  %v641 = vpop.permute.xlu0 %640
  %v643 = vmul.f32 %v635, %v641
  %644 = vst [vmem:[%s2] sm:$0x1] %v643
  // Predicated region
  $region10: #{_forward_impl.1} parent=0 // pred_check
    _
  $region11: #{_forward_impl.1} parent=0 // pred_check_branch
    %646 = sbr.rel (0) target = $region13
  $region12: #{_forward_impl.1} parent=0 // pred_region
    _
  $region13: #{_forward_impl.1} parent=0 // pred_fallthru
    _
  // Predicated region
  $region14: #{_forward_impl.1} parent=0 // pred_check
    _
  $region15: #{_forward_impl.1} parent=0 // pred_check_branch
    %648 = sbr.rel (0) target = $region17
  $region16: #{_forward_impl.1} parent=0 // pred_region
    _
  $region17: #{_forward_impl.1} parent=0 // pred_fallthru
    _

</llo_original>
